<compile_context>
chip_gen: v6e
topology: v6e:2x2x1
jax: 0.10.0
libtpu: 0.0.40
codegen_flags: <defaults>
</compile_context>

<pallas_src>
import math
import functools

import jax
import jax.numpy as jnp
from jax.experimental import pallas as pl
from jax.experimental.pallas import tpu as pltpu


# ---------------------------------------------------------------------------
# Generic linear kernel: y = x @ W + b  (bf16 MXU operands, f32 accumulation)
# ---------------------------------------------------------------------------
def _linear_kernel(x_ref, w_ref, b_ref, o_ref):
    x = x_ref[...].astype(jnp.bfloat16)                       # [TM, K] bf16
    acc = jnp.dot(x, w_ref[...], preferred_element_type=jnp.float32)
    o_ref[...] = (acc + b_ref[...].astype(jnp.float32)).astype(o_ref.dtype)


def _pick_tile(n, cap, align):
    """Largest tile <= cap that is a multiple of `align` and divides n; else full n."""
    if n <= cap:
        return n
    t = (cap // align) * align
    while t >= align:
        if n % t == 0:
            return t
        t -= align
    return n


def _linear(x2d, w_bf16, b_f32, out_dtype, row_cap=256):
    M, K = x2d.shape
    N = w_bf16.shape[1]
    TM = _pick_tile(M, row_cap, 8)
    return pl.pallas_call(
        _linear_kernel,
        out_shape=jax.ShapeDtypeStruct((M, N), out_dtype),
        grid=(M // TM,),
        in_specs=[
            pl.BlockSpec((TM, K), lambda i: (i, 0)),
            pl.BlockSpec((K, N), lambda i: (0, 0)),
            pl.BlockSpec((1, N), lambda i: (0, 0)),
        ],
        out_specs=pl.BlockSpec((TM, N), lambda i: (i, 0)),
        compiler_params=pltpu.CompilerParams(dimension_semantics=("parallel",)),
    )(x2d, w_bf16, b_f32)


# ---------------------------------------------------------------------------
# Flash attention kernel: one (batch, head, q-tile) owns an online-softmax
# accumulator; the kv-tile axis is the (innermost, "arbitrary") reduction.
# ---------------------------------------------------------------------------
def _flash_attn_kernel(q_ref, k_ref, v_ref, mask_ref, o_ref,
                       m_scr, l_scr, acc_scr, *, scale):
    ki = pl.program_id(3)

    @pl.when(ki == 0)
    def _():
        m_scr[...] = jnp.full_like(m_scr, -jnp.inf)
        l_scr[...] = jnp.zeros_like(l_scr)
        acc_scr[...] = jnp.zeros_like(acc_scr)

    q = q_ref[0, 0]                                           # [TQ, d] bf16
    k = k_ref[0, 0]                                           # [TK, d] bf16
    v = v_ref[0, 0]                                           # [TK, d] bf16
    mask = mask_ref[0, 0].astype(jnp.float32)                 # [TQ, TK] f32

    # scores = (q @ k^T) * scale + mask   (bf16 MXU operands, f32 accumulation)
    s = jax.lax.dot_general(q, k, (((1,), (1,)), ((), ())),
                            preferred_element_type=jnp.float32)
    s = s * scale + mask                                      # [TQ, TK] f32

    m_prev = m_scr[...]                                       # [TQ, 1]
    m_new = jnp.maximum(m_prev, jnp.max(s, axis=-1, keepdims=True))
    alpha = jnp.exp(m_prev - m_new)
    p = jnp.exp(s - m_new)                                    # unnormalized probs (f32)

    l_scr[...] = alpha * l_scr[...] + jnp.sum(p, axis=-1, keepdims=True)
    acc_scr[...] = alpha * acc_scr[...] + jnp.dot(
        p.astype(jnp.bfloat16), v, preferred_element_type=jnp.float32)
    m_scr[...] = m_new

    @pl.when(ki == pl.num_programs(3) - 1)
    def _():
        # Normalize AFTER the PV matmul ([TQ, d] instead of [TQ, TK]); approx recip -> EUP.
        inv_l = pl.reciprocal(l_scr[...], approx=True)
        o_ref[0, 0] = (acc_scr[...] * inv_l).astype(o_ref.dtype)


def _flash_attention(q, k, v, mask_bf16, head_dim):
    B, H, L, d = q.shape
    TQ = _pick_tile(L, 256, 8)
    TK = _pick_tile(L, 512, 128)
    nq, nk = L // TQ, L // TK
    kernel = functools.partial(_flash_attn_kernel, scale=1.0 / math.sqrt(head_dim))
    return pl.pallas_call(
        kernel,
        out_shape=jax.ShapeDtypeStruct((B, H, L, d), jnp.bfloat16),
        grid=(B, H, nq, nk),
        in_specs=[
            pl.BlockSpec((1, 1, TQ, d), lambda b, h, qi, ki: (b, h, qi, 0)),
            pl.BlockSpec((1, 1, TK, d), lambda b, h, qi, ki: (b, h, ki, 0)),
            pl.BlockSpec((1, 1, TK, d), lambda b, h, qi, ki: (b, h, ki, 0)),
            pl.BlockSpec((1, 1, TQ, TK), lambda b, h, qi, ki: (b, 0, qi, ki)),
        ],
        out_specs=pl.BlockSpec((1, 1, TQ, d), lambda b, h, qi, ki: (b, h, qi, 0)),
        scratch_shapes=[
            pltpu.VMEM((TQ, 1), jnp.float32),   # running max
            pltpu.VMEM((TQ, 1), jnp.float32),   # running denom
            pltpu.VMEM((TQ, d), jnp.float32),   # output accumulator
        ],
        compiler_params=pltpu.CompilerParams(
            dimension_semantics=("parallel", "parallel", "parallel", "arbitrary")),
    )(q, k, v, mask_bf16)


# ---------------------------------------------------------------------------
# Full SelfAttention forward (eval mode)
# ---------------------------------------------------------------------------
def self_attention(x, mask, params, num_heads):
    """x: [B, L, C] f32, mask: [B, 1, L, L] additive float mask."""
    B, L, C = x.shape
    assert C % num_heads == 0
    d = C // num_heads
    wq, bq, wk, bk, wv, bv, wo, bo = params

    # Fused QKV projection weights: [C, 3C] bf16 weights, f32 bias.
    wqkv = jnp.concatenate([wq, wk, wv], axis=1).astype(jnp.bfloat16)
    bqkv = jnp.concatenate([bq, bk, bv], axis=1).astype(jnp.float32)
    wo_bf = wo.astype(jnp.bfloat16)
    bo_f = bo.astype(jnp.float32)

    # (1) Fused QKV projection over all tokens (batch folded into rows).
    x2d = x.reshape(B * L, C)
    qkv = _linear(x2d, wqkv, bqkv, jnp.bfloat16)              # [B*L, 3C] bf16

    # Head split done wrapper-side (plain XLA copies) -> [B, H, L, d] per q/k/v;
    # the attention kernel then never slices heads in-lane.
    qkv5 = jnp.transpose(qkv.reshape(B, L, 3, num_heads, d), (2, 0, 3, 1, 4))
    q, k, v = qkv5[0], qkv5[1], qkv5[2]                       # each [B, H, L, d] bf16

    # Ship the mask in bf16 (halves HBM traffic); cast back to f32 inside the kernel.
    mask_bf = mask.astype(jnp.bfloat16)

    # (2) Flash attention.
    ctx = _flash_attention(q, k, v, mask_bf, d)               # [B, H, L, d] bf16

    # (3) Output projection.
    ctx2d = jnp.transpose(ctx, (0, 2, 1, 3)).reshape(B * L, C)
    out = _linear(ctx2d, wo_bf, bo_f, x.dtype)                # [B*L, C] f32
    return out.reshape(B, L, C)


def reference_self_attention(x, mask, params, num_heads):
    """Pure-JAX f32 reference matching the PyTorch forward (eval mode)."""
    B, L, C = x.shape
    d = C // num_heads
    wq, bq, wk, bk, wv, bv, wo, bo = params
    q = (x @ wq + bq).reshape(B, L, num_heads, d).transpose(0, 2, 1, 3)
    k = (x @ wk + bk).reshape(B, L, num_heads, d).transpose(0, 2, 1, 3)
    v = (x @ wv + bv).reshape(B, L, num_heads, d).transpose(0, 2, 1, 3)
    scores = jnp.einsum("bnqd,bnkd->bnqk", q, k) / math.sqrt(d) + mask
    p = jax.nn.softmax(scores, axis=-1)
    out = jnp.einsum("bnqk,bnkd->bnqd", p, v)
    out = out.transpose(0, 2, 1, 3).reshape(B, L, C)
    return out @ wo + bo


if __name__ == "__main__":
    B, L, C, num_heads = 2, 8, 32, 4

    key = jax.random.PRNGKey(0)
    keys = jax.random.split(key, 11)
    scale = 1.0 / math.sqrt(C)

    x = jax.random.normal(keys[0], (B, L, C), dtype=jnp.float32)
    # Additive float mask (block a few positions), broadcast over heads.
    mask = jnp.where(jax.random.uniform(keys[1], (B, 1, L, L)) < 0.1,
                     jnp.float32(-1e9), jnp.float32(0.0))

    def lin_params(kw, kb):
        w = jax.random.normal(kw, (C, C), dtype=jnp.float32) * scale  # [in, out]
        b = jax.random.normal(kb, (1, C), dtype=jnp.float32) * 0.01
        return w, b

    wq, bq = lin_params(keys[2], keys[3])
    wk, bk = lin_params(keys[4], keys[5])
    wv, bv = lin_params(keys[6], keys[7])
    wo, bo = lin_params(keys[8], keys[9])
    params = (wq, bq, wk, bk, wv, bv, wo, bo)

    out = self_attention(x, mask, params, num_heads)
    out = jax.block_until_ready(out)

    ref = reference_self_attention(x, mask, params, num_heads)
    max_diff = jnp.max(jnp.abs(out - ref))
    # bf16 MXU operands (+ bf16 mask transport, approx reciprocal) vs f32 reference:
    # relaxed tolerance per the perf-review correctness note.
    assert jnp.allclose(out, ref, atol=1e-1, rtol=1e-1), f"max abs diff {max_diff}"

    print("KERNEL_OK")
</pallas_src>

<mosaic_0001>
module attributes {stable_mosaic.version = 11 : i64} {
  func.func @_linear_kernel(%arg0: i32, %arg1: memref<16x32xf32, #tpu.memory_space<vmem>>, %arg2: memref<32x96xbf16, #tpu.memory_space<vmem>>, %arg3: memref<1x96xf32, #tpu.memory_space<vmem>>, %arg4: memref<16x96xbf16, #tpu.memory_space<vmem>>) attributes {dimension_semantics = [#tpu.dimension_semantics<parallel>], iteration_bounds = array<i64: 1>, scalar_prefetch = 0 : i64, scratch_operands = 0 : i64, tpu.core_type = #tpu.core_type<tc>, window_params = [{transform_indices = @transform_0, window_bounds = array<i64: 16, 32>}, {pipeline_mode = #tpu.pipeline_mode<synchronous>, transform_indices = @transform_1, window_bounds = array<i64: 32, 96>}, {pipeline_mode = #tpu.pipeline_mode<synchronous>, transform_indices = @transform_2, window_bounds = array<i64: 1, 96>}, {transform_indices = @transform_3, window_bounds = array<i64: 16, 96>}]} {
    %c0 = arith.constant 0 : index
    %c0_0 = arith.constant 0 : index
    %0 = vector.load %arg1[%c0, %c0_0] : memref<16x32xf32, #tpu.memory_space<vmem>>, vector<16x32xf32>
    %1 = arith.truncf %0 : vector<16x32xf32> to vector<16x32xbf16>
    %c0_1 = arith.constant 0 : index
    %c0_2 = arith.constant 0 : index
    %2 = vector.load %arg2[%c0_1, %c0_2] : memref<32x96xbf16, #tpu.memory_space<vmem>>, vector<32x96xbf16>
    %cst = arith.constant dense<0.000000e+00> : vector<16x96xf32>
    %3 = tpu.matmul %1, %2, %cst {dimension_numbers = #tpu.dot_dimension_numbers<[1], [0], [0], [1], [0, 0, 1, 1], [], []>} : vector<16x32xbf16>, vector<32x96xbf16>, vector<16x96xf32> -> vector<16x96xf32>
    %c0_3 = arith.constant 0 : index
    %c0_4 = arith.constant 0 : index
    %4 = vector.load %arg3[%c0_3, %c0_4] : memref<1x96xf32, #tpu.memory_space<vmem>>, vector<1x96xf32>
    %5 = vector.broadcast %4 : vector<1x96xf32> to vector<16x96xf32>
    %6 = arith.addf %3, %5 : vector<16x96xf32>
    %7 = arith.truncf %6 : vector<16x96xf32> to vector<16x96xbf16>
    %c0_5 = arith.constant 0 : index
    %c0_6 = arith.constant 0 : index
    %8 = vector.load %arg4[%c0_5, %c0_6] : memref<16x96xbf16, #tpu.memory_space<vmem>>, vector<16x96xbf16>
    tpu.vector_store %arg4[%c0_5, %c0_6], %7 {strides = array<i32>} : memref<16x96xbf16, #tpu.memory_space<vmem>>, vector<16x96xbf16>,
    return
  }
  func.func @transform_0(%arg0: i32) -> (i32, i32) {
    %c0_i32 = arith.constant 0 : i32
    %c0_i32_0 = arith.constant 0 : i32
    return %arg0, %c0_i32 : i32, i32
  }
  func.func @transform_1(%arg0: i32) -> (i32, i32) {
    %c0_i32 = arith.constant 0 : i32
    %c0_i32_0 = arith.constant 0 : i32
    %c0_i32_1 = arith.constant 0 : i32
    return %c0_i32, %c0_i32_0 : i32, i32
  }
  func.func @transform_2(%arg0: i32) -> (i32, i32) {
    %c0_i32 = arith.constant 0 : i32
    %c0_i32_0 = arith.constant 0 : i32
    %c0_i32_1 = arith.constant 0 : i32
    return %c0_i32, %c0_i32_0 : i32, i32
  }
  func.func @transform_3(%arg0: i32) -> (i32, i32) {
    %c0_i32 = arith.constant 0 : i32
    %c0_i32_0 = arith.constant 0 : i32
    return %arg0, %c0_i32 : i32, i32
  }
}

</mosaic_0001>

<llo_original>
// kernel: tpu_custom_call.1
$region0: #{tpu_custom_call.1}
  #allocation0 [shape = 'u32[]', space=smem, size = 0x4, offset = 0x4, fixed_abs, tag = 'smem constant byte address 0x4 - core index']
  #allocation1 [shape = 'u32[144,128]{1,0:T(1,128)}', space=vmem, size = 0x12000, scoped, tag = 'internal scratch']
  %s0 = inlined_call_operand.hbm [shape: f32[16,32], index: 0, kind: input, shape index: {}]
  %s1 = inlined_call_operand.hbm [shape: bf16[32,96], index: 1, kind: input, shape index: {}]
  %s2 = inlined_call_operand.vmem [shape: f32[1,96], index: 2, kind: input, shape index: {}]
  %s3 = inlined_call_operand.hbm [shape: bf16[16,96], index: 3, kind: output, shape index: {}]
  %s4 = sld [smem:[#allocation0]]
  $region30: #{tpu_custom_call.1} parent=0
    _
  %s6 = ssub.s32 1, %s4
  %s7 = scalar_select 0, %s6, %s4
  $region1: #{tpu_custom_call.1} parent=0
    #allocation2 [shape = 'u8[8192]{0}', space=vmem, size = 0x2000, scoped, tag = 'input window, operand 0, single buffered']
    #allocation3 [shape = 's32[1]{0}', space=sflag, size = 0x4, scoped, tag = 'scoped memory for tpu_custom_call.1']
    #allocation4 [shape = 's32[1]{0}', space=sflag, size = 0x4, scoped, tag = 'scoped memory for tpu_custom_call.1']
    #allocation5 [shape = 'u8[8192]{0}', space=vmem, size = 0x2000, scoped, tag = 'input window, operand 1, single buffered']
    #allocation6 [shape = 's32[1]{0}', space=sflag, size = 0x4, scoped, tag = 'scoped memory for tpu_custom_call.1']
    #allocation7 [shape = 'u8[4096]{0}', space=vmem, size = 0x1000, scoped, tag = 'output window, operand 0, single buffered']
    %8 = vsyncpa [#allocation3], 0
    %9 = vsyncpa [#allocation6], 0
    %10 = vsyncpa [#allocation4], 0
    // Predicated region
    $region2: #{tpu_custom_call.1} parent=1 // pred_check
      _
    $region3: #{tpu_custom_call.1} parent=1 // pred_check_branch
      %12 = sbr.rel (0) target = $region5
    $region4: #{tpu_custom_call.1} parent=1 // pred_region
      %s14 = ssub.s32 256, 256
      %15 = vsyncadd [#allocation3], %s14
      %s16 = sshll.u32 [#allocation2], 4
      %s17 = int_to_ptr.vmem [resolvable:$true] %s16
      %22 = dma.hbm_to_vmem [thread:$0]  %s0, 256, %s17, [#allocation3], 128, 128, 8
    $region5: #{tpu_custom_call.1} parent=1 // pred_fallthru
      _
    // Predicated region
    $region6: #{tpu_custom_call.1} parent=1 // pred_check
      _
    $region7: #{tpu_custom_call.1} parent=1 // pred_check_branch
      %24 = sbr.rel (0) target = $region9
    $region8: #{tpu_custom_call.1} parent=1 // pred_region
      %s26 = ssub.s32 256, 256
      %27 = vsyncadd [#allocation6], %s26
      %s28 = sshll.u32 [#allocation5], 4
      %s29 = int_to_ptr.vmem [resolvable:$true] %s28
      %34 = dma.hbm_to_vmem [thread:$0]  %s1, 256, %s29, [#allocation6], 64, 64, 4
    $region9: #{tpu_custom_call.1} parent=1 // pred_fallthru
      _
    // Predicated region
    $region10: #{tpu_custom_call.1} parent=1 // pred_check
      _
    $region11: #{tpu_custom_call.1} parent=1 // pred_check_branch
      %36 = sbr.rel (0) target = $region13
    $region12: #{tpu_custom_call.1} parent=1 // pred_region
      _
    $region13: #{tpu_custom_call.1} parent=1 // pred_fallthru
      _
    // Predicated region
    $region14: #{tpu_custom_call.1} parent=1 // pred_check
      _
    $region15: #{tpu_custom_call.1} parent=1 // pred_check_branch
      %38 = sbr.rel (0) target = $region17
    $region16: #{tpu_custom_call.1} parent=1 // pred_region
      %39 = dma.done [#allocation3], 256
    $region17: #{tpu_custom_call.1} parent=1 // pred_fallthru
      _
    // Predicated region
    $region18: #{tpu_custom_call.1} parent=1 // pred_check
      _
    $region19: #{tpu_custom_call.1} parent=1 // pred_check_branch
      %41 = sbr.rel (0) target = $region21
    $region20: #{tpu_custom_call.1} parent=1 // pred_region
      %42 = dma.done [#allocation6], 256
    $region21: #{tpu_custom_call.1} parent=1 // pred_fallthru
      _
    %v44 = vld [vmem:[#allocation2] sm:$0xff]
    %v45 = vld [vmem:[#allocation2 + $0x8] sm:$0xff]
    %v46 = vpack.c.bf16 %v45, %v44
    %v47 = vld [vmem:[#allocation5] sm:$0xf]
    %v48 = vld [vmem:[#allocation5 + $0x4] sm:$0xf]
    %v49 = vld [vmem:[#allocation5 + $0x8] sm:$0xf]
    %v50 = vld [vmem:[#allocation5 + $0xc] sm:$0xf]
    %v51 = vld [vmem:[%s2] sm:$0x1]
    %v53 = vlaneseq
    %v54 = vshrl.u32 %v53, 7
    %v55 = vsub.s32 0, %v54
    %v56 = vrot.slane %v51, %v55
    %v62 = vunpack.c.l.b16 %v47
    %v63 = vunpack.c.l.b16 %v48
    %v64 = vunpack.c.l.b16 %v49
    %v65 = vunpack.c.l.b16 %v50
    %v66 = vpack.c.b16 %v63, %v62
    %v67 = vpack.c.b16 %v65, %v64
    %vm70 = vcmask 261120
    %v72 = vsel %vm70, %v46, 0
    %74 = vmatprep.subr.bf16.mxu0 0
    %75 = vmatpush1.bf16.msra.mxu0 0
    %76 = vmatprep.subr.bf16.mxu0 0
    %77 = vmatpush1.bf16.msra.mxu0 0
    %78 = vmatprep.subr.bf16.mxu0 0
    %79 = vmatpush1.bf16.msra.mxu0 0
    %80 = vmatprep.subr.bf16.mxu0 0
    %81 = vmatpush1.bf16.msra.mxu0 0
    %82 = vmatprep.subr.bf16.mxu0 0
    %83 = vmatpush1.bf16.msra.mxu0 0
    %84 = vmatprep.subr.bf16.mxu0 0
    %85 = vmatpush1.bf16.msra.mxu0 0
    %86 = vmatprep.subr.bf16.mxu0 0
    %87 = vmatpush1.bf16.msra.mxu0 %v67
    %88 = vmatprep.subr.bf16.mxu0 0
    %89 = vmatpush1.bf16.msra.mxu0 %v66
    %90 = vmatprep.subr.bf16.mxu0 0
    %91 = vmatpush2.bf16.msra.mxu0 0
    %92 = vmatprep.subr.bf16.mxu0 0
    %93 = vmatpush2.bf16.msra.mxu0 0
    %94 = vmatprep.subr.bf16.mxu0 0
    %95 = vmatpush2.bf16.msra.mxu0 0
    %96 = vmatprep.subr.bf16.mxu0 0
    %97 = vmatpush2.bf16.msra.mxu0 0
    %98 = vmatprep.subr.bf16.mxu0 0
    %99 = vmatpush2.bf16.msra.mxu0 0
    %100 = vmatprep.subr.bf16.mxu0 0
    %101 = vmatpush2.bf16.msra.mxu0 0
    %102 = vmatprep.subr.bf16.mxu0 0
    %103 = vmatpush2.bf16.msra.mxu0 0
    %104 = vmatprep.subr.bf16.mxu0 0
    %105 = vmatpush2.bf16.msra.mxu0 0
    %106 = vmatprep.mubr.bf16.mxu0 0
    %107 = vmatmul.mubr.bf16.gmra.mxu0 %v72
    %v108 = vpop.f32.mrf.mxu0
    %v109 = vadd.f32 %v56, %v108
    %v110 = vpop.f32.mrf.mxu0
    %v111 = vpop.f32.mrf.mxu0
    %v112 = vadd.f32 %v56, %v111
    %v113 = vpop.f32.mrf.mxu0
    %114 = vdwg.mxu0
    %v115 = vpack.c.bf16 %v112, %v109
    %v117 = vunpack.c.l.b16 %v115
    %v118 = vunpack.c.h.b16 %v115
    %v119 = vpack.c.b16 %v117, %v117
    %v120 = vpack.c.b16 %v118, %v118
    %vm123 = vcmask 781312
    %124 = vst.msk [vmem:[#allocation7] sm:$0xf] %vm123, %v119
    %125 = vst.msk [vmem:[#allocation7 + $0x4] sm:$0xf] %vm123, %v120
    // Predicated region
    $region22: #{tpu_custom_call.1} parent=1 // pred_check
      _
    $region23: #{tpu_custom_call.1} parent=1 // pred_check_branch
      %127 = sbr.rel (0) target = $region25
    $region24: #{tpu_custom_call.1} parent=1 // pred_region
      %s129 = ssub.s32 128, 128
      %130 = vsyncadd [#allocation4], %s129
      %s131 = sshll.u32 [#allocation7], 4
      %s132 = int_to_ptr.vmem [resolvable:$true] %s131
      %137 = dma.vmem_to_hbm [thread:$0]  %s132, 128, %s3, [#allocation4], 64, 64, 4
    $region25: #{tpu_custom_call.1} parent=1 // pred_fallthru
      _
    // Predicated region
    $region26: #{tpu_custom_call.1} parent=1 // pred_check
      _
    $region27: #{tpu_custom_call.1} parent=1 // pred_check_branch
      %139 = sbr.rel (0) target = $region29
    $region28: #{tpu_custom_call.1} parent=1 // pred_region
      %140 = dma.done [#allocation4], 128
    $region29: #{tpu_custom_call.1} parent=1 // pred_fallthru
      _
    %141 = vsyncpa [#allocation3], 1
    %142 = vsyncpa [#allocation6], 1
    %143 = vsyncpa [#allocation4], 1

</llo_original>
